<compile_context>
chip_gen: v5e
topology: v5e:2x2
jax: 0.10.0
libtpu: 0.0.40
codegen_flags: <defaults>
</compile_context>

<pallas_src>
import functools

import numpy as np
import jax
import jax.numpy as jnp
from jax.experimental import pallas as pl
from jax.experimental.pallas import tpu as pltpu


# ------------------------------- helpers ---------------------------------------

def _round_up(n, m):
    return ((n + m - 1) // m) * m


def _pad2(a, rows, cols):
    r, c = a.shape
    if r == rows and c == cols:
        return a
    return jnp.pad(a, ((0, rows - r), (0, cols - c)))


def _vmem_budget_bytes():
    """Generation-aware scoped-VMEM budget: ~80 MiB on 128-MiB parts (v5e/v6e),
    ~36 MiB on the 64-MiB v7x (also the fallback if the query fails)."""
    try:
        cap = int(pltpu.get_tpu_info().vmem_capacity_bytes)
    except Exception:
        cap = 64 * 1024 * 1024
    return 80 * 1024 * 1024 if cap >= 100 * 1024 * 1024 else 36 * 1024 * 1024


def _largest_tile(dim, cap):
    """Largest multiple-of-128 divisor of `dim` that is <= cap (dim % 128 == 0)."""
    t = max(128, (min(dim, cap) // 128) * 128)
    while dim % t != 0:
        t -= 128
    return t


# --------------------- tiled streaming matmul (fallback path) -------------------

def _mm_kernel(a_ref, b_ref, o_ref, *, bf16_mxu, b_resident, tk):
    """Tiled out = A @ B, accumulating directly into the f32 output block (which is
    VMEM-resident across the kc grid axis).  A may be bf16 -> bf16xbf16 MXU, f32 acc."""
    kc = pl.program_id(2)

    @pl.when(kc == 0)
    def _():
        o_ref[...] = jnp.zeros_like(o_ref)

    a = a_ref[...]
    if b_resident:
        start = pl.multiple_of(kc * tk, tk)
        b = b_ref[pl.ds(start, tk), :]
    else:
        b = b_ref[...]
    if bf16_mxu:
        b = b.astype(jnp.bfloat16)
    o_ref[...] += jnp.dot(a, b, preferred_element_type=jnp.float32)


def _pallas_matmul(a, b, *, budget=None):
    """(M,K) @ (K,N) -> (M,N) f32.  Dims must be multiples of 128; A may be bf16."""
    m, k = a.shape
    k2, n = b.shape
    assert k == k2 and m % 128 == 0 and n % 128 == 0 and k % 128 == 0
    if budget is None:
        budget = _vmem_budget_bytes()
    a_item = a.dtype.itemsize
    b_item = b.dtype.itemsize
    bf16_mxu = a.dtype == jnp.bfloat16

    # Joint, VMEM-aware tile selection: HBM-bound -> maximize tm, keep tn lane-dense.
    tn = _largest_tile(n, 512)
    # Keep the whole B panel resident (DMA'd once for the whole grid) when it is small
    # and its column blocking is trivial (removes per-row-tile B re-streaming).
    b_resident = (tn == n) and (2 * k * n * b_item <= budget // 3)
    fixed = 2 * k * n * b_item if b_resident else 0

    tm = _largest_tile(m, 2048)
    tk = _largest_tile(k, 1024)

    def vmem_need(tm_, tk_):
        need = 2 * tm_ * tk_ * a_item + 2 * tm_ * tn * 4 + fixed
        if not b_resident:
            need += 2 * tk_ * tn * b_item
        return need

    while vmem_need(tm, tk) > budget and tk > 512:
        tk = _largest_tile(k, tk - 128)
    while vmem_need(tm, tk) > budget and tm > 128:
        tm = _largest_tile(m, tm - 128)
    while vmem_need(tm, tk) > budget and tk > 128:
        tk = _largest_tile(k, tk - 128)
    # Keep >= 2 row tiles when feasible so the "parallel" row axis can use both v7x cores.
    while m // tm < 2 and tm > 512:
        tm = _largest_tile(m, tm - 128)

    grid = (m // tm, n // tn, k // tk)
    if b_resident:
        b_spec = pl.BlockSpec((k, tn), lambda i, j, kc: (0, j))
    else:
        b_spec = pl.BlockSpec((tk, tn), lambda i, j, kc: (kc, j))

    return pl.pallas_call(
        functools.partial(_mm_kernel, bf16_mxu=bf16_mxu, b_resident=b_resident, tk=tk),
        out_shape=jax.ShapeDtypeStruct((m, n), jnp.float32),
        grid=grid,
        in_specs=[pl.BlockSpec((tm, tk), lambda i, j, kc: (i, kc)), b_spec],
        out_specs=pl.BlockSpec((tm, tn), lambda i, j, kc: (i, j)),
        compiler_params=pltpu.CompilerParams(
            dimension_semantics=("parallel", "parallel", "arbitrary"),
            vmem_limit_bytes=budget,
        ),
    )(a, b)


# --------------- fused (GrantConv -> Linear) layer, A VMEM-resident -------------

def _fused_layer_kernel(adj_ref, x_ref, w_ref, b_ref, o_ref, y_ref, *, relu):
    """One (GrantConv(k) -> Linear -> optional ReLU) stage.  Grid axis 0 is the power
    step j; constant-index BlockSpecs keep A, x and the output accumulator resident in
    VMEM across all steps (A is DMA'd once); only the per-step weight block is streamed.

        y_0 = x,  y_j = A @ y_{j-1}
        out = act( sum_j y_j @ W_j + bias )     (== concat_j(y_j) @ W^T + bias)
    """
    j = pl.program_id(0)

    @pl.when(j == 0)
    def _():
        y_ref[...] = x_ref[...]
        o_ref[...] = jnp.zeros_like(o_ref)

    @pl.when(j > 0)
    def _():
        y = y_ref[...]
        if adj_ref.dtype == jnp.bfloat16:        # bf16 x bf16 MXU, f32 accumulate
            y = y.astype(jnp.bfloat16)
        y_ref[...] = jnp.dot(adj_ref[...], y, preferred_element_type=jnp.float32)

    o_ref[...] += jnp.dot(y_ref[...], w_ref[...], preferred_element_type=jnp.float32)

    @pl.when(j == pl.num_programs(0) - 1)
    def _():
        out = o_ref[...] + b_ref[...]
        if relu:
            out = jnp.maximum(out, 0.0)
        o_ref[...] = out


def _fused_layer_vmem_bytes(n_p, f_p, fo_p, adj_itemsize):
    return (2 * n_p * n_p * adj_itemsize      # adjacency (conservative x2 pipeline bufs)
            + 2 * n_p * f_p * 4               # x
            + 2 * f_p * fo_p * 4              # streamed per-step weight block
            + 2 * n_p * fo_p * 4              # VMEM-resident f32 output accumulator
            + n_p * f_p * 4                   # y_j scratch
            + 2 * fo_p * 4)                   # bias


def _fused_grant_layer(adj_p, x_p, w_stack, bias_p, k, relu, budget):
    n_p, f_p = x_p.shape
    fo_p = w_stack.shape[1]
    return pl.pallas_call(
        functools.partial(_fused_layer_kernel, relu=relu),
        out_shape=jax.ShapeDtypeStruct((n_p, fo_p), jnp.float32),
        grid=(k,),
        in_specs=[
            pl.BlockSpec((n_p, n_p), lambda j: (0, 0)),    # A: DMA'd once, resident
            pl.BlockSpec((n_p, f_p), lambda j: (0, 0)),    # x: resident
            pl.BlockSpec((f_p, fo_p), lambda j: (j, 0)),   # W_j: streamed per step
            pl.BlockSpec((1, fo_p), lambda j: (0, 0)),     # bias
        ],
        out_specs=pl.BlockSpec((n_p, fo_p), lambda j: (0, 0)),  # resident accumulator
        scratch_shapes=[pltpu.VMEM((n_p, f_p), jnp.float32)],   # y_j carry
        compiler_params=pltpu.CompilerParams(
            dimension_semantics=("arbitrary",),
            vmem_limit_bytes=budget,
        ),
    )(adj_p, x_p, w_stack, bias_p)


# ------------------------------ model glue --------------------------------------

def build_dense_adjacency(num_nodes, edge_index, edge_weight, dtype=jnp.float32):
    """On-device adjacency mirroring the reference per-edge loop
         adj[src, dst] = w ; adj[dst, src] += w
    Exact match for edge lists without duplicate / reverse-duplicate directed edges
    (the usual "each undirected edge listed once" format)."""
    src, dst = edge_index[0], edge_index[1]
    w = edge_weight.astype(jnp.float32)
    adj = jnp.zeros((num_nodes, num_nodes), jnp.float32)
    adj = adj.at[src, dst].set(w)
    adj = adj.at[dst, src].add(w)
    return adj.astype(dtype)


def _stack_weight_blocks(w, k, f, f_p, fo_p):
    """nn.Linear weight (fout, k*f) -> stacked per-power blocks [W_0^T; ...; W_{k-1}^T]
    of shape (k*f_p, fo_p), each zero-padded to lane-dense (f_p, fo_p)."""
    fout = w.shape[0]
    assert w.shape[1] == k * f
    blocks = []
    for j in range(k):
        wj = w[:, j * f:(j + 1) * f].T.astype(jnp.float32)      # (f, fout)
        blocks.append(_pad2(wj, f_p, fo_p))
    return jnp.concatenate(blocks, axis=0)


def grant_layer(adj_p, x_p, w, b, k, f, relu, *, force_tiled=False, budget=None):
    """One (GrantConv(k) -> Linear -> optional ReLU) stage, entirely in padded [N_p, *]
    coordinates.  `f` is the true (unpadded) feature width of x, used to split W into
    its per-power blocks.  Returns padded [N_p, Fout_p] f32."""
    if budget is None:
        budget = _vmem_budget_bytes()
    n_p, f_p = x_p.shape
    fout = w.shape[0]
    fo_p = _round_up(fout, 128)
    w_stack = _stack_weight_blocks(w, k, f, f_p, fo_p)
    bias_p = jnp.pad(b.astype(jnp.float32), (0, fo_p - fout)).reshape(1, fo_p)

    if (not force_tiled and
            _fused_layer_vmem_bytes(n_p, f_p, fo_p, adj_p.dtype.itemsize) <= budget):
        return _fused_grant_layer(adj_p, x_p, w_stack, bias_p, k, relu, budget)

    # Fallback: adjacency too large for VMEM -> tiled streaming matmuls.
    # y_j recurrence + per-step projection accumulation; no [N, k*F] concat is ever
    # materialised and everything stays in padded (lane-dense) coordinates.
    y = x_p
    acc = _pallas_matmul(y, w_stack[:f_p], budget=budget)                    # j = 0
    for j in range(1, k):
        y = _pallas_matmul(adj_p, y, budget=budget)                          # y_j = A y_{j-1}
        acc = acc + _pallas_matmul(y, w_stack[j * f_p:(j + 1) * f_p], budget=budget)
    acc = acc + bias_p
    if relu:
        acc = jnp.maximum(acc, 0.0)
    return acc


def grant_gcn_forward(x, k_list, edge_index, edge_weight, params,
                      *, adj_dtype=jnp.bfloat16, force_tiled=False):
    """GrantGCN.forward for: n_layers=2, task_type='node_classification', sparse=False,
    atom_enc_flag=False, i.e.
      convs = [GrantConv, Linear(mlp_dims[0]), ReLU, GrantConv, Linear(last_linear_dims)]
    Each (GrantConv -> Linear) pair is fused; the [N, k*F] concat of the reference is
    never materialised (sum_j (A^j x) @ W_j^T == concat_j(A^j x) @ W^T).
    """
    # TODO(synk): the sparse=True SparseTensor branch, AtomEncoder/BatchNorm1d
    # (atom_enc_flag=True) and the global_mean_pool graph-level heads are not
    # implemented here (node_classification dense path only).
    n, f0 = x.shape
    budget = _vmem_budget_bytes()
    n_p = _round_up(n, 128)

    adj_p = _pad2(build_dense_adjacency(n, edge_index, edge_weight, dtype=adj_dtype),
                  n_p, n_p)
    x_p = _pad2(x.astype(jnp.float32), n_p, _round_up(f0, 128))

    # layer 0: GrantConv(k0) -> Linear(w1, b1) -> ReLU          (stays padded)
    h_p = grant_layer(adj_p, x_p, params["w1"], params["b1"], k_list[0], f0,
                      relu=True, force_tiled=force_tiled, budget=budget)

    # layer 1: GrantConv(k1) -> Linear(w_out, b_out)            (classification head)
    hidden = params["w1"].shape[0]
    out_p = grant_layer(adj_p, h_p, params["w_out"], params["b_out"], k_list[1], hidden,
                        relu=False, force_tiled=force_tiled, budget=budget)

    out_dim = params["w_out"].shape[0]
    return out_p[:n, :out_dim]


# ----------------------------- numpy reference ----------------------------------

def _ref_grant_conv(k, x, ei, ew):
    """Reproduces the PyTorch dense GrantConv.forward verbatim."""
    n, f = x.shape
    adj = np.zeros((n, n), np.float32)
    for i in range(ei.shape[1]):
        s, d = int(ei[0, i]), int(ei[1, i])
        adj[s, d] = ew[i]
        adj[d, s] += ew[i]
    blocks = [np.eye(n, dtype=np.float32)]
    novel = None
    for step in range(1, k):
        novel = adj if step == 1 else novel @ adj
        blocks.append(novel)
    M = np.concatenate(blocks, axis=1)                         # [N, k*N]
    Nmat = np.zeros((k * n, k * f), np.float32)                # block_diag(x,...,x)
    for j in range(k):
        Nmat[j * n:(j + 1) * n, j * f:(j + 1) * f] = x
    return M @ Nmat


def _ref_forward(x, k_list, ei, ew, p):
    gc0 = _ref_grant_conv(k_list[0], x, ei, ew)
    h = np.maximum(gc0 @ p["w1"].T + p["b1"], 0.0)
    gc1 = _ref_grant_conv(k_list[1], h, ei, ew)
    return gc1 @ p["w_out"].T + p["b_out"]


# ----------------------------------- test ---------------------------------------

if __name__ == "__main__":
    num_nodes, x_dim, hidden, out_dim = 12, 16, 32, 4
    k_list = [3, 2]
    num_edges = 16

    key = jax.random.PRNGKey(0)
    kx, kp, kw, kw1, kb1, kw2, kb2 = jax.random.split(key, 7)

    x = jax.random.normal(kx, (num_nodes, x_dim), dtype=jnp.float32)

    # Unique undirected edges (src < dst): guarantees the vectorised on-device
    # adjacency build matches the reference's sequential per-edge loop exactly.
    all_pairs = np.array([(i, j) for i in range(num_nodes)
                          for j in range(i + 1, num_nodes)], dtype=np.int32)
    perm = np.asarray(jax.random.permutation(kp, all_pairs.shape[0]))
    sel = all_pairs[perm[:num_edges]]
    edge_index = jnp.asarray(sel.T)                                  # [2, E]
    edge_weight = jax.random.uniform(kw, (num_edges,), dtype=jnp.float32)

    params = {
        "w1": 0.1 * jax.random.normal(kw1, (hidden, k_list[0] * x_dim), jnp.float32),
        "b1": 0.1 * jax.random.normal(kb1, (hidden,), jnp.float32),
        "w_out": 0.1 * jax.random.normal(kw2, (out_dim, k_list[1] * hidden), jnp.float32),
        "b_out": 0.1 * jax.random.normal(kb2, (out_dim,), jnp.float32),
    }

    ref = _ref_forward(np.asarray(x), k_list, np.asarray(edge_index),
                       np.asarray(edge_weight),
                       {k: np.asarray(v) for k, v in params.items()})

    # 1) exact (f32 adjacency) runs: fused VMEM-resident path and the tiled streaming
    #    fallback path -> strict checks against the PyTorch math.
    out_fused = jax.block_until_ready(
        grant_gcn_forward(x, k_list, edge_index, edge_weight, params,
                          adj_dtype=jnp.float32))
    np.testing.assert_allclose(np.asarray(out_fused), ref, rtol=2e-4, atol=2e-4)

    out_tiled = jax.block_until_ready(
        grant_gcn_forward(x, k_list, edge_index, edge_weight, params,
                          adj_dtype=jnp.float32, force_tiled=True))
    np.testing.assert_allclose(np.asarray(out_tiled), ref, rtol=2e-4, atol=2e-4)

    # 2) performance default: bf16-streamed adjacency (bf16 MXU inputs, f32 accumulate).
    #    Structural sanity checks against the f32 reference with bf16-level tolerance.
    out_bf16 = jax.block_until_ready(
        grant_gcn_forward(x, k_list, edge_index, edge_weight, params))
    np.testing.assert_allclose(np.asarray(out_bf16), ref, rtol=1e-1, atol=1e-1)

    out_bf16_tiled = jax.block_until_ready(
        grant_gcn_forward(x, k_list, edge_index, edge_weight, params, force_tiled=True))
    np.testing.assert_allclose(np.asarray(out_bf16_tiled), ref, rtol=1e-1, atol=1e-1)

    print("KERNEL_OK")
</pallas_src>

<mosaic_0001>
module attributes {stable_mosaic.version = 11 : i64} {
  func.func @_fused_layer_kernel(%arg0: i32, %arg1: memref<128x128xf32, #tpu.memory_space<vmem>>, %arg2: memref<128x128xf32, #tpu.memory_space<vmem>>, %arg3: memref<128x128xf32, #tpu.memory_space<vmem>>, %arg4: memref<1x128xf32, #tpu.memory_space<vmem>>, %arg5: memref<128x128xf32, #tpu.memory_space<vmem>>, %arg6: memref<128x128xf32, #tpu.memory_space<vmem>>) attributes {dimension_semantics = [#tpu.dimension_semantics<arbitrary>], iteration_bounds = array<i64: 3>, scalar_prefetch = 0 : i64, scratch_operands = 1 : i64, tpu.core_type = #tpu.core_type<tc>, window_params = [{pipeline_mode = #tpu.pipeline_mode<synchronous>, transform_indices = @transform_0, window_bounds = array<i64: 128, 128>}, {pipeline_mode = #tpu.pipeline_mode<synchronous>, transform_indices = @transform_1, window_bounds = array<i64: 128, 128>}, {transform_indices = @transform_2, window_bounds = array<i64: 128, 128>}, {pipeline_mode = #tpu.pipeline_mode<synchronous>, transform_indices = @transform_3, window_bounds = array<i64: 1, 128>}, {pipeline_mode = #tpu.pipeline_mode<synchronous>, transform_indices = @transform_4, window_bounds = array<i64: 128, 128>}]} {
    %c0_i32 = arith.constant 0 : i32
    %0 = arith.cmpi eq, %arg0, %c0_i32 : i32
    %1 = arith.extui %0 : i1 to i32
    %c0_i32_0 = arith.constant 0 : i32
    %2 = arith.cmpi ne, %1, %c0_i32_0 : i32
    scf.if %2 {
      %c0_11 = arith.constant 0 : index
      %c0_12 = arith.constant 0 : index
      %15 = vector.load %arg2[%c0_11, %c0_12] : memref<128x128xf32, #tpu.memory_space<vmem>>, vector<128x128xf32>
      %c0_13 = arith.constant 0 : index
      %c0_14 = arith.constant 0 : index
      %16 = vector.load %arg6[%c0_13, %c0_14] : memref<128x128xf32, #tpu.memory_space<vmem>>, vector<128x128xf32>
      tpu.vector_store %arg6[%c0_13, %c0_14], %15 {strides = array<i32>} : memref<128x128xf32, #tpu.memory_space<vmem>>, vector<128x128xf32>,
      %cst_15 = arith.constant 0.000000e+00 : f32
      %17 = vector.broadcast %cst_15 : f32 to vector<128x128xf32>
      %c0_16 = arith.constant 0 : index
      %c0_17 = arith.constant 0 : index
      %18 = vector.load %arg5[%c0_16, %c0_17] : memref<128x128xf32, #tpu.memory_space<vmem>>, vector<128x128xf32>
      tpu.vector_store %arg5[%c0_16, %c0_17], %17 {strides = array<i32>} : memref<128x128xf32, #tpu.memory_space<vmem>>, vector<128x128xf32>,
    } else {
    }
    %c0_i32_1 = arith.constant 0 : i32
    %3 = arith.cmpi sgt, %arg0, %c0_i32_1 : i32
    %4 = arith.extui %3 : i1 to i32
    %c0_i32_2 = arith.constant 0 : i32
    %5 = arith.cmpi ne, %4, %c0_i32_2 : i32
    scf.if %5 {
      %c0_11 = arith.constant 0 : index
      %c0_12 = arith.constant 0 : index
      %15 = vector.load %arg6[%c0_11, %c0_12] : memref<128x128xf32, #tpu.memory_space<vmem>>, vector<128x128xf32>
      %c0_13 = arith.constant 0 : index
      %c0_14 = arith.constant 0 : index
      %16 = vector.load %arg1[%c0_13, %c0_14] : memref<128x128xf32, #tpu.memory_space<vmem>>, vector<128x128xf32>
      %cst_15 = arith.constant dense<0.000000e+00> : vector<128x128xf32>
      %17 = tpu.matmul %16, %15, %cst_15 {dimension_numbers = #tpu.dot_dimension_numbers<[1], [0], [0], [1], [0, 0, 1, 1], [], []>} : vector<128x128xf32>, vector<128x128xf32>, vector<128x128xf32> -> vector<128x128xf32>
      %c0_16 = arith.constant 0 : index
      %c0_17 = arith.constant 0 : index
      %18 = vector.load %arg6[%c0_16, %c0_17] : memref<128x128xf32, #tpu.memory_space<vmem>>, vector<128x128xf32>
      tpu.vector_store %arg6[%c0_16, %c0_17], %17 {strides = array<i32>} : memref<128x128xf32, #tpu.memory_space<vmem>>, vector<128x128xf32>,
    } else {
    }
    %c0 = arith.constant 0 : index
    %c0_3 = arith.constant 0 : index
    %6 = vector.load %arg5[%c0, %c0_3] : memref<128x128xf32, #tpu.memory_space<vmem>>, vector<128x128xf32>
    %c0_4 = arith.constant 0 : index
    %c0_5 = arith.constant 0 : index
    %7 = vector.load %arg6[%c0_4, %c0_5] : memref<128x128xf32, #tpu.memory_space<vmem>>, vector<128x128xf32>
    %c0_6 = arith.constant 0 : index
    %c0_7 = arith.constant 0 : index
    %8 = vector.load %arg3[%c0_6, %c0_7] : memref<128x128xf32, #tpu.memory_space<vmem>>, vector<128x128xf32>
    %cst = arith.constant dense<0.000000e+00> : vector<128x128xf32>
    %9 = tpu.matmul %7, %8, %cst {dimension_numbers = #tpu.dot_dimension_numbers<[1], [0], [0], [1], [0, 0, 1, 1], [], []>} : vector<128x128xf32>, vector<128x128xf32>, vector<128x128xf32> -> vector<128x128xf32>
    %10 = arith.addf %6, %9 : vector<128x128xf32>
    %c0_8 = arith.constant 0 : index
    %c0_9 = arith.constant 0 : index
    %11 = vector.load %arg5[%c0_8, %c0_9] : memref<128x128xf32, #tpu.memory_space<vmem>>, vector<128x128xf32>
    tpu.vector_store %arg5[%c0_8, %c0_9], %10 {strides = array<i32>} : memref<128x128xf32, #tpu.memory_space<vmem>>, vector<128x128xf32>,
    %c2_i32 = arith.constant 2 : i32
    %12 = arith.cmpi eq, %arg0, %c2_i32 : i32
    %13 = arith.extui %12 : i1 to i32
    %c0_i32_10 = arith.constant 0 : i32
    %14 = arith.cmpi ne, %13, %c0_i32_10 : i32
    scf.if %14 {
      %c0_11 = arith.constant 0 : index
      %c0_12 = arith.constant 0 : index
      %15 = vector.load %arg5[%c0_11, %c0_12] : memref<128x128xf32, #tpu.memory_space<vmem>>, vector<128x128xf32>
      %c0_13 = arith.constant 0 : index
      %c0_14 = arith.constant 0 : index
      %16 = vector.load %arg4[%c0_13, %c0_14] : memref<1x128xf32, #tpu.memory_space<vmem>>, vector<1x128xf32>
      %17 = vector.broadcast %16 : vector<1x128xf32> to vector<128x128xf32>
      %18 = arith.addf %15, %17 : vector<128x128xf32>
      %cst_15 = arith.constant 0.000000e+00 : f32
      %19 = vector.broadcast %cst_15 : f32 to vector<128x128xf32>
      %20 = arith.maximumf %18, %19 : vector<128x128xf32>
      %c0_16 = arith.constant 0 : index
      %c0_17 = arith.constant 0 : index
      %21 = vector.load %arg5[%c0_16, %c0_17] : memref<128x128xf32, #tpu.memory_space<vmem>>, vector<128x128xf32>
      tpu.vector_store %arg5[%c0_16, %c0_17], %20 {strides = array<i32>} : memref<128x128xf32, #tpu.memory_space<vmem>>, vector<128x128xf32>,
    } else {
    }
    return
  }
  func.func @transform_0(%arg0: i32) -> (i32, i32) {
    %c0_i32 = arith.constant 0 : i32
    %c0_i32_0 = arith.constant 0 : i32
    %c0_i32_1 = arith.constant 0 : i32
    return %c0_i32, %c0_i32_0 : i32, i32
  }
  func.func @transform_1(%arg0: i32) -> (i32, i32) {
    %c0_i32 = arith.constant 0 : i32
    %c0_i32_0 = arith.constant 0 : i32
    %c0_i32_1 = arith.constant 0 : i32
    return %c0_i32, %c0_i32_0 : i32, i32
  }
  func.func @transform_2(%arg0: i32) -> (i32, i32) {
    %c0_i32 = arith.constant 0 : i32
    %c0_i32_0 = arith.constant 0 : i32
    return %arg0, %c0_i32 : i32, i32
  }
  func.func @transform_3(%arg0: i32) -> (i32, i32) {
    %c0_i32 = arith.constant 0 : i32
    %c0_i32_0 = arith.constant 0 : i32
    %c0_i32_1 = arith.constant 0 : i32
    return %c0_i32, %c0_i32_0 : i32, i32
  }
  func.func @transform_4(%arg0: i32) -> (i32, i32) {
    %c0_i32 = arith.constant 0 : i32
    %c0_i32_0 = arith.constant 0 : i32
    %c0_i32_1 = arith.constant 0 : i32
    return %c0_i32, %c0_i32_0 : i32, i32
  }
}

</mosaic_0001>

<llo_original>
// kernel: tpu_custom_call.1
$region0: #{tpu_custom_call.1}
  #allocation0 [shape = 'u32[]', space=smem, size = 0x4, offset = 0x4, fixed_abs, tag = 'smem constant byte address 0x4 - core index']
  #allocation1 [shape = 'u32[72,128]{1,0:T(1,128)}', space=vmem, size = 0x9000, scoped, tag = 'internal scratch']
  #allocation2 [shape = 'f32[128,128]{1,0:T(8,128)}', space=vmem, size = 0x10000, scoped, tag = 'scratch operand']
  %s0 = inlined_call_operand.hbm [shape: f32[128,128], index: 0, kind: input, shape index: {}]
  %s1 = inlined_call_operand.hbm [shape: f32[128,128], index: 1, kind: input, shape index: {}]
  %s2 = inlined_call_operand.hbm [shape: f32[384,128], index: 2, kind: input, shape index: {}]
  %s3 = inlined_call_operand.vmem [shape: f32[1,128], index: 3, kind: input, shape index: {}]
  %s4 = inlined_call_operand.hbm [shape: f32[128,128], index: 4, kind: output, shape index: {}]
  %s5 = sld [smem:[#allocation0]]
  $region73: #{tpu_custom_call.1} parent=0
    _
  %s7 = ssub.s32 1, %s5
  %s8 = scalar_select 0, %s7, %s5
  $region1: #{tpu_custom_call.1} parent=0
    #allocation3 [shape = 'u8[65536]{0}', space=vmem, size = 0x10000, scoped, tag = 'input window, operand 0, single buffered']
    #allocation4 [shape = 's32[2]{0}', space=sflag, size = 0x8, scoped, tag = 'scoped memory for tpu_custom_call.1']
    #allocation5 [shape = 's32[2]{0}', space=sflag, size = 0x8, scoped, tag = 'scoped memory for tpu_custom_call.1']
    #allocation6 [shape = 'u8[65536]{0}', space=vmem, size = 0x10000, scoped, tag = 'input window, operand 1, single buffered']
    #allocation7 [shape = 's32[1]{0}', space=sflag, size = 0x4, scoped, tag = 'scoped memory for tpu_custom_call.1']
    #allocation8 [shape = 'u8[131072]{0}', space=vmem, size = 0x20000, scoped, tag = 'input window, operand 2']
    #allocation9 [shape = 'u8[65536]{0}', space=vmem, size = 0x10000, scoped, tag = 'output window, operand 0, single buffered']
    %9 = vsyncpa [#allocation4], 0
    %10 = vsyncpa [#allocation7], 0
    %11 = vsyncpa [#allocation5], 0
    loop: start=0, step=1, limit=5
    $region2: #{tpu_custom_call.1} parent=1 // loop_pre_header
      _
    $region3: #{tpu_custom_call.1} parent=1 // loop_header
      %s13 = sphi 0, %s17
      %p14 = scmp.ge.s32.totalorder %s13, 5
      %s21 = sphi 0, %s21
      %s23 = sphi 0, %s21
      %s24 = sphi 0, %s23
      %s38 = sphi 0, %s24
      %s42 = sphi 0, %s42
      %s44 = sphi 0, %s42
      %s45 = sphi 0, %s44
      %s59 = sphi 0, %s45
      %s65 = sphi 0, %s67
      %s68 = sphi 0, %s65
      %s69 = sphi 0, %s68
      %s85 = sphi 0, %s69
      %s89 = sphi 0, %s89
      %s91 = sphi 0, %s89
      %s92 = sphi 0, %s91
      %s106 = sphi 0, %s92
      %s110 = sphi 0, %s110
      %s112 = sphi 0, %s110
      %s113 = sphi 0, %s112
      %s127 = sphi 0, %s113
    $region4: #{tpu_custom_call.1} parent=1 // loop_header_branch
      %16 = sbr.rel (%p14) target = $region8
    $region5: #{tpu_custom_call.1} parent=1 // loop_body
      %s18 = ssub.s32 %s13, 1
      %s19 = ssub.s32 %s13, 2
      %s20 = sadd.s32 %s13, 1
      %s22 = sadd.s32 %s21, 1
      %p25 = scmp.eq.s32.totalorder %s13, 2
      %p26 = scmp.ne.s32.totalorder %s21, %s23
      %p27 = scmp.eq.s32.totalorder %s13, 0
      %p28 = por %p26, %p27
      %p29 = scmp.ne.s32.totalorder %s21, %s23
      %p30 = scmp.eq.s32.totalorder %s18, 2
      %p31 = por %p29, %p30
      %p32 = scmp.ne.s32.totalorder %s23, %s24
      %p33 = scmp.eq.s32.totalorder %s18, 0
      %p34 = por %p32, %p33
      %p35 = scmp.ne.s32.totalorder %s23, %s24
      %p36 = scmp.eq.s32.totalorder %s19, 2
      %p37 = por %p35, %p36
      %p39 = scmp.ne.s32.totalorder %s24, %s38
      %p40 = scmp.eq.s32.totalorder %s19, 0
      %p41 = por %p39, %p40
      %s43 = sadd.s32 %s42, 1
      %p46 = scmp.eq.s32.totalorder %s13, 2
      %p47 = scmp.ne.s32.totalorder %s42, %s44
      %p48 = scmp.eq.s32.totalorder %s13, 0
      %p49 = por %p47, %p48
      %p50 = scmp.ne.s32.totalorder %s42, %s44
      %p51 = scmp.eq.s32.totalorder %s18, 2
      %p52 = por %p50, %p51
      %p53 = scmp.ne.s32.totalorder %s44, %s45
      %p54 = scmp.eq.s32.totalorder %s18, 0
      %p55 = por %p53, %p54
      %p56 = scmp.ne.s32.totalorder %s44, %s45
      %p57 = scmp.eq.s32.totalorder %s19, 2
      %p58 = por %p56, %p57
      %p60 = scmp.ne.s32.totalorder %s45, %s59
      %p61 = scmp.eq.s32.totalorder %s19, 0
      %p62 = por %p60, %p61
      %s63 = ssub.s32 %s13, %s20
      %p64 = scmp.eq.s32.totalorder %s63, 0
      %s66 = sadd.s32 %s65, 1
      %s67 = scalar_select %p64, %s65, %s66
      %p70 = pneg %p64
      %p71 = scmp.eq.s32.totalorder %s13, 2
      %p72 = por %p70, %p71
      %p73 = scmp.ne.s32.totalorder %s65, %s68
      %p74 = scmp.eq.s32.totalorder %s13, 0
      %p75 = por %p73, %p74
      %p76 = scmp.ne.s32.totalorder %s65, %s68
      %p77 = scmp.eq.s32.totalorder %s18, 2
      %p78 = por %p76, %p77
      %p79 = scmp.ne.s32.totalorder %s68, %s69
      %p80 = scmp.eq.s32.totalorder %s18, 0
      %p81 = por %p79, %p80
      %p82 = scmp.ne.s32.totalorder %s68, %s69
      %p83 = scmp.eq.s32.totalorder %s19, 2
      %p84 = por %p82, %p83
      %p86 = scmp.ne.s32.totalorder %s69, %s85
      %p87 = scmp.eq.s32.totalorder %s19, 0
      %p88 = por %p86, %p87
      %s90 = sadd.s32 %s89, 1
      %p93 = scmp.eq.s32.totalorder %s13, 2
      %p94 = scmp.ne.s32.totalorder %s89, %s91
      %p95 = scmp.eq.s32.totalorder %s13, 0
      %p96 = por %p94, %p95
      %p97 = scmp.ne.s32.totalorder %s89, %s91
      %p98 = scmp.eq.s32.totalorder %s18, 2
      %p99 = por %p97, %p98
      %p100 = scmp.ne.s32.totalorder %s91, %s92
      %p101 = scmp.eq.s32.totalorder %s18, 0
      %p102 = por %p100, %p101
      %p103 = scmp.ne.s32.totalorder %s91, %s92
      %p104 = scmp.eq.s32.totalorder %s19, 2
      %p105 = por %p103, %p104
      %p107 = scmp.ne.s32.totalorder %s92, %s106
      %p108 = scmp.eq.s32.totalorder %s19, 0
      %p109 = por %p107, %p108
      %s111 = sadd.s32 %s110, 1
      %p114 = scmp.eq.s32.totalorder %s13, 2
      %p115 = scmp.ne.s32.totalorder %s110, %s112
      %p116 = scmp.eq.s32.totalorder %s13, 0
      %p117 = por %p115, %p116
      %p118 = scmp.ne.s32.totalorder %s110, %s112
      %p119 = scmp.eq.s32.totalorder %s18, 2
      %p120 = por %p118, %p119
      %p121 = scmp.ne.s32.totalorder %s112, %s113
      %p122 = scmp.eq.s32.totalorder %s18, 0
      %p123 = por %p121, %p122
      %p124 = scmp.ne.s32.totalorder %s112, %s113
      %p125 = scmp.eq.s32.totalorder %s19, 2
      %p126 = por %p124, %p125
      %p128 = scmp.ne.s32.totalorder %s113, %s127
      %p129 = scmp.eq.s32.totalorder %s19, 0
      %p130 = por %p128, %p129
      %p131 = scmp.le.s32.totalorder 1, %s13
      %p132 = scmp.lt.s32.totalorder %s13, 4
      %p133 = pnand %p131, %p132
      %p134 = pneg %p133
      // Predicated region
      $region9: #{tpu_custom_call.1} parent=5 // pred_check
        _
      $region10: #{tpu_custom_call.1} parent=5 // pred_check_branch
        %136 = sbr.rel (%p133) target = $region12
      $region11: #{tpu_custom_call.1} parent=5 // pred_region
        %s137 = ssub.s32 %s13, 1
        // Predicated region
        $region13: #{tpu_custom_call.1} parent=11 // pred_check
          %p138 = pneg %p34
        $region14: #{tpu_custom_call.1} parent=11 // pred_check_branch
          %140 = sbr.rel (%p138) target = $region16
        $region15: #{tpu_custom_call.1} parent=11 // pred_region
          %142 = vsyncadd [#allocation4], 0
          %s143 = sshll.u32 %s0, 4
          %s144 = int_to_ptr.hbm [resolvable:$true] %s143
          %s145 = sshll.u32 [#allocation3], 4
          %s146 = int_to_ptr.vmem [resolvable:$true] %s145
          %151 = dma.hbm_to_vmem [thread:$0]  %s144, 2048, %s146, [#allocation4], 128, 128, 8
        $region16: #{tpu_custom_call.1} parent=11 // pred_fallthru
          _
        // Predicated region
        $region17: #{tpu_custom_call.1} parent=11 // pred_check
          %p152 = pneg %p55
        $region18: #{tpu_custom_call.1} parent=11 // pred_check_branch
          %154 = sbr.rel (%p152) target = $region20
        $region19: #{tpu_custom_call.1} parent=11 // pred_region
          %156 = vsyncadd [#allocation7], 0
          %s157 = sshll.u32 %s1, 4
          %s158 = int_to_ptr.hbm [resolvable:$true] %s157
          %s159 = sshll.u32 [#allocation6], 4
          %s160 = int_to_ptr.vmem [resolvable:$true] %s159
          %165 = dma.hbm_to_vmem [thread:$0]  %s158, 2048, %s160, [#allocation7], 128, 128, 8
        $region20: #{tpu_custom_call.1} parent=11 // pred_fallthru
          _
        // Predicated region
        $region21: #{tpu_custom_call.1} parent=11 // pred_check
          %p166 = pneg %p102
        $region22: #{tpu_custom_call.1} parent=11 // pred_check_branch
          %168 = sbr.rel (%p166) target = $region24
        $region23: #{tpu_custom_call.1} parent=11 // pred_region
          _
        $region24: #{tpu_custom_call.1} parent=11 // pred_fallthru
          _
      $region12: #{tpu_custom_call.1} parent=5 // pred_fallthru
        _
      %p169 = scmp.lt.s32.totalorder %s13, 3
      // Predicated region
      $region25: #{tpu_custom_call.1} parent=5 // pred_check
        %p170 = pneg %p169
      $region26: #{tpu_custom_call.1} parent=5 // pred_check_branch
        %172 = sbr.rel (%p170) target = $region28
      $region27: #{tpu_custom_call.1} parent=5 // pred_region
        // Predicated region
        $region29: #{tpu_custom_call.1} parent=27 // pred_check
          %p173 = pneg %p75
        $region30: #{tpu_custom_call.1} parent=27 // pred_check_branch
          %175 = sbr.rel (%p173) target = $region32
        $region31: #{tpu_custom_call.1} parent=27 // pred_region
          %s176 = sand.u32 %s13, 1
          %s177 = scalar_lea.sflag [#allocation4], %s176
          %s178 = sand.u32 %s65, 1
          %s179 = smul.addr %s178, 128
          %s180 = scalar_lea.vmem [#allocation8], %s179
          %s181 = smul.u32 16, %s13
          %183 = vsyncadd %s177, 0
          %s184 = smul.addr %s181, 8
          %s185 = scalar_lea.hbm %s2, %s184
          %s186 = sshll.u32 %s185, 4
          %s187 = int_to_ptr.hbm [resolvable:$true] %s186
          %s188 = sshll.u32 %s180, 4
          %s189 = int_to_ptr.vmem [resolvable:$true] %s188
          %194 = dma.hbm_to_vmem [thread:$0]  %s187, 2048, %s189, %s177, 128, 128, 8
        $region32: #{tpu_custom_call.1} parent=27 // pred_fallthru
          _
      $region28: #{tpu_custom_call.1} parent=5 // pred_fallthru
        _
      %p195 = scmp.le.s32.totalorder 1, %s13
      %p196 = scmp.lt.s32.totalorder %s13, 4
      %p197 = pnand %p195, %p196
      %p198 = pneg %p197
      // Predicated region
      $region33: #{tpu_custom_call.1} parent=5 // pred_check
        _
      $region34: #{tpu_custom_call.1} parent=5 // pred_check_branch
        %200 = sbr.rel (%p197) target = $region36
      $region35: #{tpu_custom_call.1} parent=5 // pred_region
        %s201 = ssub.s32 %s13, 1
        // Predicated region
        $region37: #{tpu_custom_call.1} parent=35 // pred_check
          %p202 = pneg %p34
        $region38: #{tpu_custom_call.1} parent=35 // pred_check_branch
          %204 = sbr.rel (%p202) target = $region40
        $region39: #{tpu_custom_call.1} parent=35 // pred_region
          %206 = dma.done [#allocation4], 2048
        $region40: #{tpu_custom_call.1} parent=35 // pred_fallthru
          _
        // Predicated region
        $region41: #{tpu_custom_call.1} parent=35 // pred_check
          %p207 = pneg %p55
        $region42: #{tpu_custom_call.1} parent=35 // pred_check_branch
          %209 = sbr.rel (%p207) target = $region44
        $region43: #{tpu_custom_call.1} parent=35 // pred_region
          %211 = dma.done [#allocation7], 2048
        $region44: #{tpu_custom_call.1} parent=35 // pred_fallthru
          _
        %s212 = sand.u32 %s18, 1
        %s213 = scalar_lea.sflag [#allocation4], %s212
        %s214 = sand.u32 %s68, 1
        %s215 = smul.addr %s214, 128
        %s216 = scalar_lea.vmem [#allocation8], %s215
        // Predicated region
        $region45: #{tpu_custom_call.1} parent=35 // pred_check
          %p217 = pneg %p81
        $region46: #{tpu_custom_call.1} parent=35 // pred_check_branch
          %219 = sbr.rel (%p217) target = $region48
        $region47: #{tpu_custom_call.1} parent=35 // pred_region
          %221 = dma.done %s213, 2048
        $region48: #{tpu_custom_call.1} parent=35 // pred_fallthru
          _
        %p222 = pneg %p34
        %p223 = pneg %p31
        %p224 = pneg %p55
        %p225 = pneg %p52
        %s226 = sand.u32 %s18, 1
        %s227 = scalar_lea.sflag [#allocation4], %s226
        %s228 = sand.u32 %s68, 1
        %s229 = smul.addr %s228, 128
        %s230 = scalar_lea.vmem [#allocation8], %s229
        %p231 = pneg %p81
        %p232 = pneg %p78
        %p233 = pneg %p102
        %p234 = pneg %p99
        %p235 = pneg %p123
        %p236 = pneg %p120
        %s237 = smul.u32 16, %s18
        %p238 = scmp.eq.s32.totalorder %s18, 0
        // Predicated region
        $region49: #{tpu_custom_call.1} parent=35 // pred_check
          %p239 = pneg %p238
        $region50: #{tpu_custom_call.1} parent=35 // pred_check_branch
          %241 = sbr.rel (%p239) target = $region52
        $region51: #{tpu_custom_call.1} parent=35 // pred_region
          %v242 = vld [vmem:[#allocation6] sm:$0xff]
          %v243 = vld [vmem:[#allocation6 + $0x8] sm:$0xff]
          %v244 = vld [vmem:[#allocation6 + $0x10] sm:$0xff]
          %v245 = vld [vmem:[#allocation6 + $0x18] sm:$0xff]
          %v246 = vld [vmem:[#allocation6 + $0x20] sm:$0xff]
          %v247 = vld [vmem:[#allocation6 + $0x28] sm:$0xff]
          %v248 = vld [vmem:[#allocation6 + $0x30] sm:$0xff]
          %v249 = vld [vmem:[#allocation6 + $0x38] sm:$0xff]
          %v250 = vld [vmem:[#allocation6 + $0x40] sm:$0xff]
          %v251 = vld [vmem:[#allocation6 + $0x48] sm:$0xff]
          %v252 = vld [vmem:[#allocation6 + $0x50] sm:$0xff]
          %v253 = vld [vmem:[#allocation6 + $0x58] sm:$0xff]
          %v254 = vld [vmem:[#allocation6 + $0x60] sm:$0xff]
          %v255 = vld [vmem:[#allocation6 + $0x68] sm:$0xff]
          %v256 = vld [vmem:[#allocation6 + $0x70] sm:$0xff]
          %v257 = vld [vmem:[#allocation6 + $0x78] sm:$0xff]
          %258 = vst [vmem:[#allocation2] sm:$0xff] %v242
          %259 = vst [vmem:[#allocation2 + $0x8] sm:$0xff] %v243
          %260 = vst [vmem:[#allocation2 + $0x10] sm:$0xff] %v244
          %261 = vst [vmem:[#allocation2 + $0x18] sm:$0xff] %v245
          %262 = vst [vmem:[#allocation2 + $0x20] sm:$0xff] %v246
          %263 = vst [vmem:[#allocation2 + $0x28] sm:$0xff] %v247
          %264 = vst [vmem:[#allocation2 + $0x30] sm:$0xff] %v248
          %265 = vst [vmem:[#allocation2 + $0x38] sm:$0xff] %v249
          %266 = vst [vmem:[#allocation2 + $0x40] sm:$0xff] %v250
          %267 = vst [vmem:[#allocation2 + $0x48] sm:$0xff] %v251
          %268 = vst [vmem:[#allocation2 + $0x50] sm:$0xff] %v252
          %269 = vst [vmem:[#allocation2 + $0x58] sm:$0xff] %v253
          %270 = vst [vmem:[#allocation2 + $0x60] sm:$0xff] %v254
          %271 = vst [vmem:[#allocation2 + $0x68] sm:$0xff] %v255
          %272 = vst [vmem:[#allocation2 + $0x70] sm:$0xff] %v256
          %273 = vst [vmem:[#allocation2 + $0x78] sm:$0xff] %v257
          %274 = vst [vmem:[#allocation9] sm:$0xff] 0.0
          %275 = vst [vmem:[#allocation9 + $0x8] sm:$0xff] 0.0
          %276 = vst [vmem:[#allocation9 + $0x10] sm:$0xff] 0.0
          %277 = vst [vmem:[#allocation9 + $0x18] sm:$0xff] 0.0
          %278 = vst [vmem:[#allocation9 + $0x20] sm:$0xff] 0.0
          %279 = vst [vmem:[#allocation9 + $0x28] sm:$0xff] 0.0
          %280 = vst [vmem:[#allocation9 + $0x30] sm:$0xff] 0.0
          %281 = vst [vmem:[#allocation9 + $0x38] sm:$0xff] 0.0
          %282 = vst [vmem:[#allocation9 + $0x40] sm:$0xff] 0.0
          %283 = vst [vmem:[#allocation9 + $0x48] sm:$0xff] 0.0
          %284 = vst [vmem:[#allocation9 + $0x50] sm:$0xff] 0.0
          %285 = vst [vmem:[#allocation9 + $0x58] sm:$0xff] 0.0
          %286 = vst [vmem:[#allocation9 + $0x60] sm:$0xff] 0.0
          %287 = vst [vmem:[#allocation9 + $0x68] sm:$0xff] 0.0
          %288 = vst [vmem:[#allocation9 + $0x70] sm:$0xff] 0.0
          %289 = vst [vmem:[#allocation9 + $0x78] sm:$0xff] 0.0
        $region52: #{tpu_custom_call.1} parent=35 // pred_fallthru
          _
        %p290 = scmp.gt.s32.totalorder %s18, 0
        // Predicated region
        $region53: #{tpu_custom_call.1} parent=35 // pred_check
          %p291 = pneg %p290
        $region54: #{tpu_custom_call.1} parent=35 // pred_check_branch
          %293 = sbr.rel (%p291) target = $region56
        $region55: #{tpu_custom_call.1} parent=35 // pred_region
          %v294 = vld [vmem:[#allocation2] sm:$0xff]
          %v295 = vld [vmem:[#allocation2 + $0x8] sm:$0xff]
          %v296 = vld [vmem:[#allocation2 + $0x10] sm:$0xff]
          %v297 = vld [vmem:[#allocation2 + $0x18] sm:$0xff]
          %v298 = vld [vmem:[#allocation2 + $0x20] sm:$0xff]
          %v299 = vld [vmem:[#allocation2 + $0x28] sm:$0xff]
          %v300 = vld [vmem:[#allocation2 + $0x30] sm:$0xff]
          %v301 = vld [vmem:[#allocation2 + $0x38] sm:$0xff]
          %v302 = vld [vmem:[#allocation2 + $0x40] sm:$0xff]
          %v303 = vld [vmem:[#allocation2 + $0x48] sm:$0xff]
          %v304 = vld [vmem:[#allocation2 + $0x50] sm:$0xff]
          %v305 = vld [vmem:[#allocation2 + $0x58] sm:$0xff]
          %v306 = vld [vmem:[#allocation2 + $0x60] sm:$0xff]
          %v307 = vld [vmem:[#allocation2 + $0x68] sm:$0xff]
          %v308 = vld [vmem:[#allocation2 + $0x70] sm:$0xff]
          %v309 = vld [vmem:[#allocation2 + $0x78] sm:$0xff]
          %v310 = vld [vmem:[#allocation3] sm:$0xff]
          %v311 = vld [vmem:[#allocation3 + $0x8] sm:$0xff]
          %v312 = vld [vmem:[#allocation3 + $0x10] sm:$0xff]
          %v313 = vld [vmem:[#allocation3 + $0x18] sm:$0xff]
          %v314 = vld [vmem:[#allocation3 + $0x20] sm:$0xff]
          %v315 = vld [vmem:[#allocation3 + $0x28] sm:$0xff]
          %v316 = vld [vmem:[#allocation3 + $0x30] sm:$0xff]
          %v317 = vld [vmem:[#allocation3 + $0x38] sm:$0xff]
          %v318 = vld [vmem:[#allocation3 + $0x40] sm:$0xff]
          %v319 = vld [vmem:[#allocation3 + $0x48] sm:$0xff]
          %v320 = vld [vmem:[#allocation3 + $0x50] sm:$0xff]
          %v321 = vld [vmem:[#allocation3 + $0x58] sm:$0xff]
          %v322 = vld [vmem:[#allocation3 + $0x60] sm:$0xff]
          %v323 = vld [vmem:[#allocation3 + $0x68] sm:$0xff]
          %v324 = vld [vmem:[#allocation3 + $0x70] sm:$0xff]
          %v325 = vld [vmem:[#allocation3 + $0x78] sm:$0xff]
          %326 = vmatpush.msra.mxu0 %v309
          %327 = vmatpush.msra.mxu0 %v308
          %328 = vmatpush.msra.mxu0 %v307
          %329 = vmatpush.msra.mxu0 %v306
          %330 = vmatpush.msra.mxu0 %v305
          %331 = vmatpush.msra.mxu0 %v304
          %332 = vmatpush.msra.mxu0 %v303
          %333 = vmatpush.msra.mxu0 %v302
          %334 = vmatpush.msra.mxu0 %v301
          %335 = vmatpush.msra.mxu0 %v300
          %336 = vmatpush.msra.mxu0 %v299
          %337 = vmatpush.msra.mxu0 %v298
          %338 = vmatpush.msra.mxu0 %v297
          %339 = vmatpush.msra.mxu0 %v296
          %340 = vmatpush.msra.mxu0 %v295
          %341 = vmatpush.msra.mxu0 %v294
          %342 = vmatmul.f32.gmra.mxu0 %v310
          %v343 = vpop.f32.mrf.mxu0
          %v344 = vadd.f32 0.0, %v343
          %345 = vmatmul.f32.gmra.mxu0 %v311
          %v346 = vpop.f32.mrf.mxu0
          %v347 = vadd.f32 0.0, %v346
          %348 = vmatmul.f32.gmra.mxu0 %v312
          %v349 = vpop.f32.mrf.mxu0
          %v350 = vadd.f32 0.0, %v349
          %351 = vmatmul.f32.gmra.mxu0 %v313
          %v352 = vpop.f32.mrf.mxu0
          %v353 = vadd.f32 0.0, %v352
          %354 = vmatmul.f32.gmra.mxu0 %v314
          %v355 = vpop.f32.mrf.mxu0
          %v356 = vadd.f32 0.0, %v355
          %357 = vmatmul.f32.gmra.mxu0 %v315
          %v358 = vpop.f32.mrf.mxu0
          %v359 = vadd.f32 0.0, %v358
          %360 = vmatmul.f32.gmra.mxu0 %v316
          %v361 = vpop.f32.mrf.mxu0
          %v362 = vadd.f32 0.0, %v361
          %363 = vmatmul.f32.gmra.mxu0 %v317
          %v364 = vpop.f32.mrf.mxu0
          %v365 = vadd.f32 0.0, %v364
          %366 = vmatmul.f32.gmra.mxu0 %v318
          %v367 = vpop.f32.mrf.mxu0
          %v368 = vadd.f32 0.0, %v367
          %369 = vmatmul.f32.gmra.mxu0 %v319
          %v370 = vpop.f32.mrf.mxu0
          %v371 = vadd.f32 0.0, %v370
          %372 = vmatmul.f32.gmra.mxu0 %v320
          %v373 = vpop.f32.mrf.mxu0
          %v374 = vadd.f32 0.0, %v373
          %375 = vmatmul.f32.gmra.mxu0 %v321
          %v376 = vpop.f32.mrf.mxu0
          %v377 = vadd.f32 0.0, %v376
          %378 = vmatmul.f32.gmra.mxu0 %v322
          %v379 = vpop.f32.mrf.mxu0
          %v380 = vadd.f32 0.0, %v379
          %381 = vmatmul.f32.gmra.mxu0 %v323
          %v382 = vpop.f32.mrf.mxu0
          %v383 = vadd.f32 0.0, %v382
          %384 = vmatmul.f32.gmra.mxu0 %v324
          %v385 = vpop.f32.mrf.mxu0
          %v386 = vadd.f32 0.0, %v385
          %387 = vmatmul.f32.gmra.mxu0 %v325
          %v388 = vpop.f32.mrf.mxu0
          %v389 = vadd.f32 0.0, %v388
          %390 = vdwg.mxu0
          %391 = vst [vmem:[#allocation2] sm:$0xff] %v344
          %392 = vst [vmem:[#allocation2 + $0x8] sm:$0xff] %v347
          %393 = vst [vmem:[#allocation2 + $0x10] sm:$0xff] %v350
          %394 = vst [vmem:[#allocation2 + $0x18] sm:$0xff] %v353
          %395 = vst [vmem:[#allocation2 + $0x20] sm:$0xff] %v356
          %396 = vst [vmem:[#allocation2 + $0x28] sm:$0xff] %v359
          %397 = vst [vmem:[#allocation2 + $0x30] sm:$0xff] %v362
          %398 = vst [vmem:[#allocation2 + $0x38] sm:$0xff] %v365
          %399 = vst [vmem:[#allocation2 + $0x40] sm:$0xff] %v368
          %400 = vst [vmem:[#allocation2 + $0x48] sm:$0xff] %v371
          %401 = vst [vmem:[#allocation2 + $0x50] sm:$0xff] %v374
          %402 = vst [vmem:[#allocation2 + $0x58] sm:$0xff] %v377
          %403 = vst [vmem:[#allocation2 + $0x60] sm:$0xff] %v380
          %404 = vst [vmem:[#allocation2 + $0x68] sm:$0xff] %v383
          %405 = vst [vmem:[#allocation2 + $0x70] sm:$0xff] %v386
          %406 = vst [vmem:[#allocation2 + $0x78] sm:$0xff] %v389
        $region56: #{tpu_custom_call.1} parent=35 // pred_fallthru
          _
        %v407 = vld [vmem:[#allocation9] sm:$0xff]
        %v408 = vld [vmem:[#allocation9 + $0x8] sm:$0xff]
        %v409 = vld [vmem:[#allocation9 + $0x10] sm:$0xff]
        %v410 = vld [vmem:[#allocation9 + $0x18] sm:$0xff]
        %v411 = vld [vmem:[#allocation9 + $0x20] sm:$0xff]
        %v412 = vld [vmem:[#allocation9 + $0x28] sm:$0xff]
        %v413 = vld [vmem:[#allocation9 + $0x30] sm:$0xff]
        %v414 = vld [vmem:[#allocation9 + $0x38] sm:$0xff]
        %v415 = vld [vmem:[#allocation9 + $0x40] sm:$0xff]
        %v416 = vld [vmem:[#allocation9 + $0x48] sm:$0xff]
        %v417 = vld [vmem:[#allocation9 + $0x50] sm:$0xff]
        %v418 = vld [vmem:[#allocation9 + $0x58] sm:$0xff]
        %v419 = vld [vmem:[#allocation9 + $0x60] sm:$0xff]
        %v420 = vld [vmem:[#allocation9 + $0x68] sm:$0xff]
        %v421 = vld [vmem:[#allocation9 + $0x70] sm:$0xff]
        %v422 = vld [vmem:[#allocation9 + $0x78] sm:$0xff]
        %v423 = vld [vmem:[#allocation2] sm:$0xff]
        %v424 = vld [vmem:[#allocation2 + $0x8] sm:$0xff]
        %v425 = vld [vmem:[#allocation2 + $0x10] sm:$0xff]
        %v426 = vld [vmem:[#allocation2 + $0x18] sm:$0xff]
        %v427 = vld [vmem:[#allocation2 + $0x20] sm:$0xff]
        %v428 = vld [vmem:[#allocation2 + $0x28] sm:$0xff]
        %v429 = vld [vmem:[#allocation2 + $0x30] sm:$0xff]
        %v430 = vld [vmem:[#allocation2 + $0x38] sm:$0xff]
        %v431 = vld [vmem:[#allocation2 + $0x40] sm:$0xff]
        %v432 = vld [vmem:[#allocation2 + $0x48] sm:$0xff]
        %v433 = vld [vmem:[#allocation2 + $0x50] sm:$0xff]
        %v434 = vld [vmem:[#allocation2 + $0x58] sm:$0xff]
        %v435 = vld [vmem:[#allocation2 + $0x60] sm:$0xff]
        %v436 = vld [vmem:[#allocation2 + $0x68] sm:$0xff]
        %v437 = vld [vmem:[#allocation2 + $0x70] sm:$0xff]
        %v438 = vld [vmem:[#allocation2 + $0x78] sm:$0xff]
        %v439 = vld [vmem:[%s216] sm:$0xff]
        %v440 = vld [vmem:[%s216 + $0x8] sm:$0xff]
        %v441 = vld [vmem:[%s216 + $0x10] sm:$0xff]
        %v442 = vld [vmem:[%s216 + $0x18] sm:$0xff]
        %v443 = vld [vmem:[%s216 + $0x20] sm:$0xff]
        %v444 = vld [vmem:[%s216 + $0x28] sm:$0xff]
        %v445 = vld [vmem:[%s216 + $0x30] sm:$0xff]
        %v446 = vld [vmem:[%s216 + $0x38] sm:$0xff]
        %v447 = vld [vmem:[%s216 + $0x40] sm:$0xff]
        %v448 = vld [vmem:[%s216 + $0x48] sm:$0xff]
        %v449 = vld [vmem:[%s216 + $0x50] sm:$0xff]
        %v450 = vld [vmem:[%s216 + $0x58] sm:$0xff]
        %v451 = vld [vmem:[%s216 + $0x60] sm:$0xff]
        %v452 = vld [vmem:[%s216 + $0x68] sm:$0xff]
        %v453 = vld [vmem:[%s216 + $0x70] sm:$0xff]
        %v454 = vld [vmem:[%s216 + $0x78] sm:$0xff]
        %455 = vmatpush.msra.mxu0 %v454
        %456 = vmatpush.msra.mxu0 %v453
        %457 = vmatpush.msra.mxu0 %v452
        %458 = vmatpush.msra.mxu0 %v451
        %459 = vmatpush.msra.mxu0 %v450
        %460 = vmatpush.msra.mxu0 %v449
        %461 = vmatpush.msra.mxu0 %v448
        %462 = vmatpush.msra.mxu0 %v447
        %463 = vmatpush.msra.mxu0 %v446
        %464 = vmatpush.msra.mxu0 %v445
        %465 = vmatpush.msra.mxu0 %v444
        %466 = vmatpush.msra.mxu0 %v443
        %467 = vmatpush.msra.mxu0 %v442
        %468 = vmatpush.msra.mxu0 %v441
        %469 = vmatpush.msra.mxu0 %v440
        %470 = vmatpush.msra.mxu0 %v439
        %471 = vmatmul.f32.gmra.mxu0 %v423
        %v472 = vpop.f32.mrf.mxu0
        %v473 = vadd.f32 0.0, %v472
        %474 = vmatmul.f32.gmra.mxu0 %v424
        %v475 = vpop.f32.mrf.mxu0
        %v476 = vadd.f32 0.0, %v475
        %477 = vmatmul.f32.gmra.mxu0 %v425
        %v478 = vpop.f32.mrf.mxu0
        %v479 = vadd.f32 0.0, %v478
        %480 = vmatmul.f32.gmra.mxu0 %v426
        %v481 = vpop.f32.mrf.mxu0
        %v482 = vadd.f32 0.0, %v481
        %483 = vmatmul.f32.gmra.mxu0 %v427
        %v484 = vpop.f32.mrf.mxu0
        %v485 = vadd.f32 0.0, %v484
        %486 = vmatmul.f32.gmra.mxu0 %v428
        %v487 = vpop.f32.mrf.mxu0
        %v488 = vadd.f32 0.0, %v487
        %489 = vmatmul.f32.gmra.mxu0 %v429
        %v490 = vpop.f32.mrf.mxu0
        %v491 = vadd.f32 0.0, %v490
        %492 = vmatmul.f32.gmra.mxu0 %v430
        %v493 = vpop.f32.mrf.mxu0
        %v494 = vadd.f32 0.0, %v493
        %495 = vmatmul.f32.gmra.mxu0 %v431
        %v496 = vpop.f32.mrf.mxu0
        %v497 = vadd.f32 0.0, %v496
        %498 = vmatmul.f32.gmra.mxu0 %v432
        %v499 = vpop.f32.mrf.mxu0
        %v500 = vadd.f32 0.0, %v499
        %501 = vmatmul.f32.gmra.mxu0 %v433
        %v502 = vpop.f32.mrf.mxu0
        %v503 = vadd.f32 0.0, %v502
        %504 = vmatmul.f32.gmra.mxu0 %v434
        %v505 = vpop.f32.mrf.mxu0
        %v506 = vadd.f32 0.0, %v505
        %507 = vmatmul.f32.gmra.mxu0 %v435
        %v508 = vpop.f32.mrf.mxu0
        %v509 = vadd.f32 0.0, %v508
        %510 = vmatmul.f32.gmra.mxu0 %v436
        %v511 = vpop.f32.mrf.mxu0
        %v512 = vadd.f32 0.0, %v511
        %513 = vmatmul.f32.gmra.mxu0 %v437
        %v514 = vpop.f32.mrf.mxu0
        %v515 = vadd.f32 0.0, %v514
        %516 = vmatmul.f32.gmra.mxu0 %v438
        %v517 = vpop.f32.mrf.mxu0
        %v518 = vadd.f32 0.0, %v517
        %519 = vdwg.mxu0
        %v520 = vadd.f32 %v407, %v473
        %v521 = vadd.f32 %v408, %v476
        %v522 = vadd.f32 %v409, %v479
        %v523 = vadd.f32 %v410, %v482
        %v524 = vadd.f32 %v411, %v485
        %v525 = vadd.f32 %v412, %v488
        %v526 = vadd.f32 %v413, %v491
        %v527 = vadd.f32 %v414, %v494
        %v528 = vadd.f32 %v415, %v497
        %v529 = vadd.f32 %v416, %v500
        %v530 = vadd.f32 %v417, %v503
        %v531 = vadd.f32 %v418, %v506
        %v532 = vadd.f32 %v419, %v509
        %v533 = vadd.f32 %v420, %v512
        %v534 = vadd.f32 %v421, %v515
        %v535 = vadd.f32 %v422, %v518
        %536 = vst [vmem:[#allocation9] sm:$0xff] %v520
        %537 = vst [vmem:[#allocation9 + $0x8] sm:$0xff] %v521
        %538 = vst [vmem:[#allocation9 + $0x10] sm:$0xff] %v522
        %539 = vst [vmem:[#allocation9 + $0x18] sm:$0xff] %v523
        %540 = vst [vmem:[#allocation9 + $0x20] sm:$0xff] %v524
        %541 = vst [vmem:[#allocation9 + $0x28] sm:$0xff] %v525
        %542 = vst [vmem:[#allocation9 + $0x30] sm:$0xff] %v526
        %543 = vst [vmem:[#allocation9 + $0x38] sm:$0xff] %v527
        %544 = vst [vmem:[#allocation9 + $0x40] sm:$0xff] %v528
        %545 = vst [vmem:[#allocation9 + $0x48] sm:$0xff] %v529
        %546 = vst [vmem:[#allocation9 + $0x50] sm:$0xff] %v530
        %547 = vst [vmem:[#allocation9 + $0x58] sm:$0xff] %v531
        %548 = vst [vmem:[#allocation9 + $0x60] sm:$0xff] %v532
        %549 = vst [vmem:[#allocation9 + $0x68] sm:$0xff] %v533
        %550 = vst [vmem:[#allocation9 + $0x70] sm:$0xff] %v534
        %551 = vst [vmem:[#allocation9 + $0x78] sm:$0xff] %v535
        %p552 = scmp.eq.s32.totalorder %s18, 2
        // Predicated region
        $region57: #{tpu_custom_call.1} parent=35 // pred_check
          %p553 = pneg %p552
        $region58: #{tpu_custom_call.1} parent=35 // pred_check_branch
          %555 = sbr.rel (%p553) target = $region60
        $region59: #{tpu_custom_call.1} parent=35 // pred_region
          %v556 = vld [vmem:[#allocation9] sm:$0xff]
          %v557 = vld [vmem:[#allocation9 + $0x8] sm:$0xff]
          %v558 = vld [vmem:[#allocation9 + $0x10] sm:$0xff]
          %v559 = vld [vmem:[#allocation9 + $0x18] sm:$0xff]
          %v560 = vld [vmem:[#allocation9 + $0x20] sm:$0xff]
          %v561 = vld [vmem:[#allocation9 + $0x28] sm:$0xff]
          %v562 = vld [vmem:[#allocation9 + $0x30] sm:$0xff]
          %v563 = vld [vmem:[#allocation9 + $0x38] sm:$0xff]
          %v564 = vld [vmem:[#allocation9 + $0x40] sm:$0xff]
          %v565 = vld [vmem:[#allocation9 + $0x48] sm:$0xff]
          %v566 = vld [vmem:[#allocation9 + $0x50] sm:$0xff]
          %v567 = vld [vmem:[#allocation9 + $0x58] sm:$0xff]
          %v568 = vld [vmem:[#allocation9 + $0x60] sm:$0xff]
          %v569 = vld [vmem:[#allocation9 + $0x68] sm:$0xff]
          %v570 = vld [vmem:[#allocation9 + $0x70] sm:$0xff]
          %v571 = vld [vmem:[#allocation9 + $0x78] sm:$0xff]
          %v572 = vld [vmem:[%s3] sm:$0x1]
          %v574 = vperm.slane %v572, 0
          %v576 = vadd.f32 %v556, %v574
          %v577 = vadd.f32 %v557, %v574
          %v578 = vadd.f32 %v558, %v574
          %v579 = vadd.f32 %v559, %v574
          %v580 = vadd.f32 %v560, %v574
          %v581 = vadd.f32 %v561, %v574
          %v582 = vadd.f32 %v562, %v574
          %v583 = vadd.f32 %v563, %v574
          %v584 = vadd.f32 %v564, %v574
          %v585 = vadd.f32 %v565, %v574
          %v586 = vadd.f32 %v566, %v574
          %v587 = vadd.f32 %v567, %v574
          %v588 = vadd.f32 %v568, %v574
          %v589 = vadd.f32 %v569, %v574
          %v590 = vadd.f32 %v570, %v574
          %v591 = vadd.f32 %v571, %v574
          %v592 = vmax.f32 %v576, 0.0
          %v593 = vmax.f32 %v577, 0.0
          %v594 = vmax.f32 %v578, 0.0
          %v595 = vmax.f32 %v579, 0.0
          %v596 = vmax.f32 %v580, 0.0
          %v597 = vmax.f32 %v581, 0.0
          %v598 = vmax.f32 %v582, 0.0
          %v599 = vmax.f32 %v583, 0.0
          %v600 = vmax.f32 %v584, 0.0
          %v601 = vmax.f32 %v585, 0.0
          %v602 = vmax.f32 %v586, 0.0
          %v603 = vmax.f32 %v587, 0.0
          %v604 = vmax.f32 %v588, 0.0
          %v605 = vmax.f32 %v589, 0.0
          %v606 = vmax.f32 %v590, 0.0
          %v607 = vmax.f32 %v591, 0.0
          %608 = vst [vmem:[#allocation9] sm:$0xff] %v592
          %609 = vst [vmem:[#allocation9 + $0x8] sm:$0xff] %v593
          %610 = vst [vmem:[#allocation9 + $0x10] sm:$0xff] %v594
          %611 = vst [vmem:[#allocation9 + $0x18] sm:$0xff] %v595
          %612 = vst [vmem:[#allocation9 + $0x20] sm:$0xff] %v596
          %613 = vst [vmem:[#allocation9 + $0x28] sm:$0xff] %v597
          %614 = vst [vmem:[#allocation9 + $0x30] sm:$0xff] %v598
          %615 = vst [vmem:[#allocation9 + $0x38] sm:$0xff] %v599
          %616 = vst [vmem:[#allocation9 + $0x40] sm:$0xff] %v600
          %617 = vst [vmem:[#allocation9 + $0x48] sm:$0xff] %v601
          %618 = vst [vmem:[#allocation9 + $0x50] sm:$0xff] %v602
          %619 = vst [vmem:[#allocation9 + $0x58] sm:$0xff] %v603
          %620 = vst [vmem:[#allocation9 + $0x60] sm:$0xff] %v604
          %621 = vst [vmem:[#allocation9 + $0x68] sm:$0xff] %v605
          %622 = vst [vmem:[#allocation9 + $0x70] sm:$0xff] %v606
          %623 = vst [vmem:[#allocation9 + $0x78] sm:$0xff] %v607
        $region60: #{tpu_custom_call.1} parent=35 // pred_fallthru
          _
        // Predicated region
        $region61: #{tpu_custom_call.1} parent=35 // pred_check
          %p624 = pneg %p120
        $region62: #{tpu_custom_call.1} parent=35 // pred_check_branch
          %626 = sbr.rel (%p624) target = $region64
        $region63: #{tpu_custom_call.1} parent=35 // pred_region
          %628 = vsyncadd [#allocation5], 0
          %s629 = sshll.u32 [#allocation9], 4
          %s630 = int_to_ptr.vmem [resolvable:$true] %s629
          %s631 = sshll.u32 %s4, 4
          %s632 = int_to_ptr.hbm [resolvable:$true] %s631
          %637 = dma.vmem_to_hbm [thread:$0]  %s630, 2048, %s632, [#allocation5], 128, 128, 8
        $region64: #{tpu_custom_call.1} parent=35 // pred_fallthru
          _
        // Predicated region
        $region65: #{tpu_custom_call.1} parent=35 // pred_check
          %p638 = pneg %p120
        $region66: #{tpu_custom_call.1} parent=35 // pred_check_branch
          %640 = sbr.rel (%p638) target = $region68
        $region67: #{tpu_custom_call.1} parent=35 // pred_region
          %642 = dma.done [#allocation5], 2048
        $region68: #{tpu_custom_call.1} parent=35 // pred_fallthru
          _
      $region36: #{tpu_custom_call.1} parent=5 // pred_fallthru
        _
      %p643 = scmp.le.s32.totalorder 2, %s13
      // Predicated region
      $region69: #{tpu_custom_call.1} parent=5 // pred_check
        %p644 = pneg %p643
      $region70: #{tpu_custom_call.1} parent=5 // pred_check_branch
        %646 = sbr.rel (%p644) target = $region72
      $region71: #{tpu_custom_call.1} parent=5 // pred_region
        %s647 = ssub.s32 %s13, 2
      $region72: #{tpu_custom_call.1} parent=5 // pred_fallthru
        _
    $region6: #{tpu_custom_call.1} parent=1 // loop_footer
      %s17 = sadd.s32 1, %s13
    $region7: #{tpu_custom_call.1} parent=1 // loop_footer_branch
      %12 = sbr.rel target = $region3
    $region8: #{tpu_custom_call.1} parent=1 // loop_exit
      _
    %648 = vsyncpa [#allocation4], 1
    %s649 = scalar_lea.sflag [#allocation4], 1
    %650 = vsyncpa %s649, 1
    %651 = vsyncpa [#allocation7], 1
    %652 = vsyncpa [#allocation5], 1
    %s653 = scalar_lea.sflag [#allocation5], 1
    %654 = vsyncpa %s653, 1

</llo_original>
